<compile_context>
chip_gen: v7x
topology: tpu7x:2x2x1
jax: 0.10.0
libtpu: 0.0.40
codegen_flags: <defaults>
</compile_context>

<pallas_src>
import jax
import jax.numpy as jnp
from jax.experimental import pallas as pl
from jax.experimental.pallas import tpu as pltpu


# ----------------------------- helpers (plain JAX glue) -----------------------------

def _interp_matrix(out_size: int, in_size: int) -> jnp.ndarray:
    """1-D bilinear interpolation matrix (out_size, in_size), align_corners=True."""
    if out_size == 1:
        src = jnp.zeros((1,), jnp.float32)
    else:
        src = jnp.arange(out_size, dtype=jnp.float32) * ((in_size - 1) / (out_size - 1))
    lo = jnp.clip(jnp.floor(src).astype(jnp.int32), 0, in_size - 1)
    hi = jnp.minimum(lo + 1, in_size - 1)
    w = src - lo.astype(jnp.float32)
    m = jnp.zeros((out_size, in_size), jnp.float32)
    rows = jnp.arange(out_size)
    m = m.at[rows, lo].add(1.0 - w)
    m = m.at[rows, hi].add(w)
    return m


def _conv_band_weights(wc, W: int) -> jnp.ndarray:
    """Fold the width taps of a 3x3 conv (PyTorch layout (Cout, Cin, 3, 3)) into banded
    matrices. Returns (3, W*Cin, W*Cout): M[dh][(w+dw-1)*Cin+ci, w*Cout+co] = wc[co,ci,dh,dw]
    (out-of-range width positions are simply dropped == zero padding)."""
    f32 = jnp.float32
    mats = []
    for dh in range(3):
        m = None
        for dw in range(3):
            shift = jnp.eye(W, k=1 - dw, dtype=f32)          # S[src,w] = 1  iff  src == w+dw-1
            term = jnp.kron(shift, wc[:, :, dh, dw].T.astype(f32))
            m = term if m is None else m + term
        mats.append(m)
    return jnp.stack(mats, axis=0)


# ----------------------------- the fused Pallas kernel -----------------------------

def _lateral_connect_kernel(bu_ref, td_ref, a_ref, wl_ref, bk_ref, wc_ref,
                            blr_ref, bcr_ref, out_ref, ypad_ref):
    # bu_ref : (1, H,  W*Cin)   bottom_up (row layout [h, w*Cin+ci])
    # td_ref : (1, Hs, Ws*Cout) top_down  (row layout [k, l*Cout+co])
    # a_ref  : (H, Hs)          height interpolation matrix
    # wl_ref : (W*Cin, W*Cout)  kron(I_W, Wl^T)        (1x1 conv, block-diag over width)
    # bk_ref : (Ws*Cout, W*Cout) kron(B^T, I_Cout)     (width interpolation)
    # wc_ref : (3, W*Cout, W*Cout) banded 3x3 weights  (one slab per height tap)
    # blr_ref, bcr_ref : (1, W*Cout) biases tiled over width
    # out_ref: (1, H, W*Cout)
    # ypad_ref: VMEM scratch (H+2, W*Cout) -- height-padded intermediate
    H = bu_ref.shape[1]
    WCo = out_ref.shape[2]

    # 1x1 lateral conv: (H, W*Cin) @ (W*Cin, W*Cout)
    lat = jnp.dot(bu_ref[0], wl_ref[...], preferred_element_type=jnp.float32)

    # separable bilinear upsample (align_corners=True): height then width
    t1 = jnp.dot(a_ref[...], td_ref[0], preferred_element_type=jnp.float32)   # (H, Ws*Cout)
    up = jnp.dot(t1, bk_ref[...], preferred_element_type=jnp.float32)         # (H, W*Cout)

    y = lat + up + blr_ref[...]                                               # (H, W*Cout)

    # height-padded intermediate lives only in VMEM (width padding is inside the banded weights)
    zrow = jnp.zeros((1, WCo), jnp.float32)
    ypad_ref[0:1, :] = zrow
    ypad_ref[H + 1:H + 2, :] = zrow
    ypad_ref[1:H + 1, :] = y

    # 3x3 conv: three banded matmuls (K = W*Cout), height taps = sublane slices of the scratch
    acc = jnp.dot(ypad_ref[0:H, :], wc_ref[0], preferred_element_type=jnp.float32)
    acc = acc + jnp.dot(ypad_ref[1:H + 1, :], wc_ref[1], preferred_element_type=jnp.float32)
    acc = acc + jnp.dot(ypad_ref[2:H + 2, :], wc_ref[2], preferred_element_type=jnp.float32)

    out_ref[...] = (acc + bcr_ref[...]).reshape(1, H, WCo)


# ----------------------------- wrapper -----------------------------

@jax.jit
def lateral_connect_forward(bottom_up_nchw, top_down_nchw, params):
    wl, bl, wc, bc = params["wl"], params["bl"], params["wc"], params["bc"]
    f32 = jnp.float32

    N, Cin, H, W = bottom_up_nchw.shape
    _, Cout, Hs, Ws = top_down_nchw.shape

    # NCHW -> row layout [h, w*C + c]
    bu_row = jnp.transpose(bottom_up_nchw, (0, 2, 3, 1)).reshape(N, H, W * Cin).astype(f32)
    td_row = jnp.transpose(top_down_nchw, (0, 2, 3, 1)).reshape(N, Hs, Ws * Cout).astype(f32)

    A = _interp_matrix(H, Hs)                                        # (H, Hs)
    B = _interp_matrix(W, Ws)                                        # (W, Ws)
    WL = jnp.kron(jnp.eye(W, dtype=f32), wl.T.astype(f32))           # (W*Cin, W*Cout)
    BK = jnp.kron(B.T, jnp.eye(Cout, dtype=f32))                     # (Ws*Cout, W*Cout)
    WC = _conv_band_weights(wc, W)                                   # (3, W*Cout, W*Cout)
    bl_row = jnp.tile(bl.astype(f32), W).reshape(1, W * Cout)
    bc_row = jnp.tile(bc.astype(f32), W).reshape(1, W * Cout)

    out_row = pl.pallas_call(
        _lateral_connect_kernel,
        out_shape=jax.ShapeDtypeStruct((N, H, W * Cout), f32),
        grid=(N,),
        in_specs=[
            pl.BlockSpec((1, H, W * Cin), lambda n: (n, 0, 0)),
            pl.BlockSpec((1, Hs, Ws * Cout), lambda n: (n, 0, 0)),
            pl.BlockSpec((H, Hs), lambda n: (0, 0)),
            pl.BlockSpec((W * Cin, W * Cout), lambda n: (0, 0)),
            pl.BlockSpec((Ws * Cout, W * Cout), lambda n: (0, 0)),
            pl.BlockSpec((3, W * Cout, W * Cout), lambda n: (0, 0, 0)),
            pl.BlockSpec((1, W * Cout), lambda n: (0, 0)),
            pl.BlockSpec((1, W * Cout), lambda n: (0, 0)),
        ],
        out_specs=pl.BlockSpec((1, H, W * Cout), lambda n: (n, 0, 0)),
        scratch_shapes=[pltpu.VMEM((H + 2, W * Cout), f32)],
        compiler_params=pltpu.CompilerParams(dimension_semantics=("parallel",)),
    )(bu_row, td_row, A, WL, BK, WC, bl_row, bc_row)

    # row layout -> NCHW (matches PyTorch output layout)
    return jnp.transpose(out_row.reshape(N, H, W, Cout), (0, 3, 1, 2))


def init_params(key, input_channel, output_channel):
    k1, k2, k3, k4 = jax.random.split(key, 4)
    # PyTorch-shaped parameters
    wl = 0.1 * jax.random.normal(k1, (output_channel, input_channel), jnp.float32)       # (Cout, Cin)
    bl = 0.1 * jax.random.normal(k2, (output_channel,), jnp.float32)
    wc = 0.05 * jax.random.normal(k3, (output_channel, output_channel, 3, 3), jnp.float32)  # (Cout, Cin, kh, kw)
    bc = 0.1 * jax.random.normal(k4, (output_channel,), jnp.float32)
    return dict(wl=wl, bl=bl, wc=wc, bc=bc)


# ----------------------------- pure-JAX reference -----------------------------

def reference_forward(bottom_up_nchw, top_down_nchw, params):
    wl, bl, wc, bc = params["wl"], params["bl"], params["wc"], params["bc"]
    N, Cin, H, W = bottom_up_nchw.shape
    _, Cout, Hs, Ws = top_down_nchw.shape

    lat = jnp.einsum("nihw,oi->nohw", bottom_up_nchw.astype(jnp.float32), wl) + bl[None, :, None, None]
    A = _interp_matrix(H, Hs)
    B = _interp_matrix(W, Ws)
    up = jnp.einsum("Hk,nckw->ncHw", A, top_down_nchw.astype(jnp.float32))
    up = jnp.einsum("Wl,nchl->nchW", B, up)
    y = lat + up

    yp = jnp.pad(y, ((0, 0), (0, 0), (1, 1), (1, 1)))
    out = jnp.zeros((N, Cout, H, W), jnp.float32) + bc[None, :, None, None]
    for dh in range(3):
        for dw in range(3):
            out = out + jnp.einsum("nihw,oi->nohw",
                                   yp[:, :, dh:dh + H, dw:dw + W], wc[:, :, dh, dw])
    return out


# ----------------------------- main -----------------------------

if __name__ == "__main__":
    input_channel, output_channel = 4, 8
    N, H, W = 2, 16, 16          # bottom_up spatial size
    Hs, Ws = 8, 8                # top_down spatial size (gets upsampled to H, W)

    key = jax.random.PRNGKey(0)
    kp, kb, kt = jax.random.split(key, 3)
    params = init_params(kp, input_channel, output_channel)

    bottom_up = jax.random.normal(kb, (N, input_channel, H, W), jnp.float32)    # NCHW
    top_down = jax.random.normal(kt, (N, output_channel, Hs, Ws), jnp.float32)  # NCHW

    out = lateral_connect_forward(bottom_up, top_down, params)
    out = jax.block_until_ready(out)

    ref = reference_forward(bottom_up, top_down, params)
    assert out.shape == (N, output_channel, H, W)
    assert jnp.allclose(out, ref, atol=1e-4, rtol=1e-4), "mismatch vs reference"

    print("KERNEL_OK")
</pallas_src>

<mosaic_0001>
module attributes {stable_mosaic.version = 11 : i64} {
  func.func private @main(%arg0: i32) attributes {dimension_semantics = [#tpu.dimension_semantics<core_parallel>], iteration_bounds = array<i64: 2>, tpu.core_type = #tpu.core_type<sc_scalar_subcore>, window_params = []} {
    return
  }
}

module attributes {stable_mosaic.version = 11 : i64} {
  func.func private @main(%arg0: i32) attributes {dimension_semantics = [#tpu.dimension_semantics<core_parallel>], iteration_bounds = array<i64: 2>, tpu.core_type = #tpu.core_type<sc_scalar_subcore>, window_params = []} {
    return
  }
}

module attributes {stable_mosaic.version = 11 : i64} {
  func.func @_lateral_connect_kernel(%arg0: i32, %arg1: memref<1x16x64xf32, #tpu.memory_space<vmem>>, %arg2: memref<1x8x64xf32, #tpu.memory_space<vmem>>, %arg3: memref<16x8xf32, #tpu.memory_space<vmem>>, %arg4: memref<64x128xf32, #tpu.memory_space<vmem>>, %arg5: memref<64x128xf32, #tpu.memory_space<vmem>>, %arg6: memref<3x128x128xf32, #tpu.memory_space<vmem>>, %arg7: memref<1x128xf32, #tpu.memory_space<vmem>>, %arg8: memref<1x128xf32, #tpu.memory_space<vmem>>, %arg9: memref<1x16x128xf32, #tpu.memory_space<vmem>>, %arg10: memref<18x128xf32, #tpu.memory_space<vmem>>) attributes {dimension_semantics = [#tpu.dimension_semantics<parallel>], iteration_bounds = array<i64: 2>, scalar_prefetch = 0 : i64, scratch_operands = 1 : i64, tpu.core_type = #tpu.core_type<tc>, window_params = [{transform_indices = @transform_0, window_bounds = array<i64: 1, 16, 64>}, {transform_indices = @transform_1, window_bounds = array<i64: 1, 8, 64>}, {pipeline_mode = #tpu.pipeline_mode<synchronous>, transform_indices = @transform_2, window_bounds = array<i64: 16, 8>}, {pipeline_mode = #tpu.pipeline_mode<synchronous>, transform_indices = @transform_3, window_bounds = array<i64: 64, 128>}, {pipeline_mode = #tpu.pipeline_mode<synchronous>, transform_indices = @transform_4, window_bounds = array<i64: 64, 128>}, {pipeline_mode = #tpu.pipeline_mode<synchronous>, transform_indices = @transform_5, window_bounds = array<i64: 3, 128, 128>}, {pipeline_mode = #tpu.pipeline_mode<synchronous>, transform_indices = @transform_6, window_bounds = array<i64: 1, 128>}, {pipeline_mode = #tpu.pipeline_mode<synchronous>, transform_indices = @transform_7, window_bounds = array<i64: 1, 128>}, {transform_indices = @transform_8, window_bounds = array<i64: 1, 16, 128>}]} {
    %c0 = arith.constant 0 : index
    %c0_0 = arith.constant 0 : index
    %c0_1 = arith.constant 0 : index
    %0 = vector.load %arg1[%c0, %c0_0, %c0_1] : memref<1x16x64xf32, #tpu.memory_space<vmem>>, vector<1x16x64xf32>
    %1 = vector.shape_cast %0 : vector<1x16x64xf32> to vector<16x64xf32>
    %c0_2 = arith.constant 0 : index
    %c0_3 = arith.constant 0 : index
    %2 = vector.load %arg4[%c0_2, %c0_3] : memref<64x128xf32, #tpu.memory_space<vmem>>, vector<64x128xf32>
    %cst = arith.constant dense<0.000000e+00> : vector<16x128xf32>
    %3 = tpu.matmul %1, %2, %cst {dimension_numbers = #tpu.dot_dimension_numbers<[1], [0], [0], [1], [0, 0, 1, 1], [], []>} : vector<16x64xf32>, vector<64x128xf32>, vector<16x128xf32> -> vector<16x128xf32>
    %c0_4 = arith.constant 0 : index
    %c0_5 = arith.constant 0 : index
    %4 = vector.load %arg3[%c0_4, %c0_5] : memref<16x8xf32, #tpu.memory_space<vmem>>, vector<16x8xf32>
    %c0_6 = arith.constant 0 : index
    %c0_7 = arith.constant 0 : index
    %c0_8 = arith.constant 0 : index
    %5 = vector.load %arg2[%c0_6, %c0_7, %c0_8] : memref<1x8x64xf32, #tpu.memory_space<vmem>>, vector<1x8x64xf32>
    %6 = vector.shape_cast %5 : vector<1x8x64xf32> to vector<8x64xf32>
    %cst_9 = arith.constant dense<0.000000e+00> : vector<16x64xf32>
    %7 = tpu.matmul %4, %6, %cst_9 {dimension_numbers = #tpu.dot_dimension_numbers<[1], [0], [0], [1], [0, 0, 1, 1], [], []>} : vector<16x8xf32>, vector<8x64xf32>, vector<16x64xf32> -> vector<16x64xf32>
    %c0_10 = arith.constant 0 : index
    %c0_11 = arith.constant 0 : index
    %8 = vector.load %arg5[%c0_10, %c0_11] : memref<64x128xf32, #tpu.memory_space<vmem>>, vector<64x128xf32>
    %cst_12 = arith.constant dense<0.000000e+00> : vector<16x128xf32>
    %9 = tpu.matmul %7, %8, %cst_12 {dimension_numbers = #tpu.dot_dimension_numbers<[1], [0], [0], [1], [0, 0, 1, 1], [], []>} : vector<16x64xf32>, vector<64x128xf32>, vector<16x128xf32> -> vector<16x128xf32>
    %10 = arith.addf %3, %9 : vector<16x128xf32>
    %c0_13 = arith.constant 0 : index
    %c0_14 = arith.constant 0 : index
    %11 = vector.load %arg7[%c0_13, %c0_14] : memref<1x128xf32, #tpu.memory_space<vmem>>, vector<1x128xf32>
    %12 = vector.broadcast %11 : vector<1x128xf32> to vector<16x128xf32>
    %13 = arith.addf %10, %12 : vector<16x128xf32>
    %cst_15 = arith.constant 0.000000e+00 : f32
    %14 = vector.broadcast %cst_15 : f32 to vector<1x128xf32>
    %c0_16 = arith.constant 0 : index
    %c0_17 = arith.constant 0 : index
    %15 = vector.load %arg10[%c0_16, %c0_17] : memref<18x128xf32, #tpu.memory_space<vmem>>, vector<1x128xf32>
    tpu.vector_store %arg10[%c0_16, %c0_17], %14 {strides = array<i32>} : memref<18x128xf32, #tpu.memory_space<vmem>>, vector<1x128xf32>,
    %c17 = arith.constant 17 : index
    %c0_18 = arith.constant 0 : index
    %16 = vector.load %arg10[%c17, %c0_18] : memref<18x128xf32, #tpu.memory_space<vmem>>, vector<1x128xf32>
    tpu.vector_store %arg10[%c17, %c0_18], %14 {strides = array<i32>} : memref<18x128xf32, #tpu.memory_space<vmem>>, vector<1x128xf32>,
    %c1 = arith.constant 1 : index
    %c0_19 = arith.constant 0 : index
    %17 = vector.load %arg10[%c1, %c0_19] : memref<18x128xf32, #tpu.memory_space<vmem>>, vector<16x128xf32>
    tpu.vector_store %arg10[%c1, %c0_19], %13 {strides = array<i32>} : memref<18x128xf32, #tpu.memory_space<vmem>>, vector<16x128xf32>,
    %c0_20 = arith.constant 0 : index
    %c0_21 = arith.constant 0 : index
    %18 = vector.load %arg10[%c0_20, %c0_21] : memref<18x128xf32, #tpu.memory_space<vmem>>, vector<16x128xf32>
    %c0_22 = arith.constant 0 : index
    %c0_23 = arith.constant 0 : index
    %c0_24 = arith.constant 0 : index
    %19 = vector.load %arg6[%c0_22, %c0_23, %c0_24] : memref<3x128x128xf32, #tpu.memory_space<vmem>>, vector<1x128x128xf32>
    %20 = vector.shape_cast %19 : vector<1x128x128xf32> to vector<128x128xf32>
    %cst_25 = arith.constant dense<0.000000e+00> : vector<16x128xf32>
    %21 = tpu.matmul %18, %20, %cst_25 {dimension_numbers = #tpu.dot_dimension_numbers<[1], [0], [0], [1], [0, 0, 1, 1], [], []>} : vector<16x128xf32>, vector<128x128xf32>, vector<16x128xf32> -> vector<16x128xf32>
    %c1_26 = arith.constant 1 : index
    %c0_27 = arith.constant 0 : index
    %22 = vector.load %arg10[%c1_26, %c0_27] : memref<18x128xf32, #tpu.memory_space<vmem>>, vector<16x128xf32>
    %c1_28 = arith.constant 1 : index
    %c0_29 = arith.constant 0 : index
    %c0_30 = arith.constant 0 : index
    %23 = vector.load %arg6[%c1_28, %c0_29, %c0_30] : memref<3x128x128xf32, #tpu.memory_space<vmem>>, vector<1x128x128xf32>
    %24 = vector.shape_cast %23 : vector<1x128x128xf32> to vector<128x128xf32>
    %cst_31 = arith.constant dense<0.000000e+00> : vector<16x128xf32>
    %25 = tpu.matmul %22, %24, %cst_31 {dimension_numbers = #tpu.dot_dimension_numbers<[1], [0], [0], [1], [0, 0, 1, 1], [], []>} : vector<16x128xf32>, vector<128x128xf32>, vector<16x128xf32> -> vector<16x128xf32>
    %26 = arith.addf %21, %25 : vector<16x128xf32>
    %c2 = arith.constant 2 : index
    %c0_32 = arith.constant 0 : index
    %27 = vector.load %arg10[%c2, %c0_32] : memref<18x128xf32, #tpu.memory_space<vmem>>, vector<16x128xf32>
    %c2_33 = arith.constant 2 : index
    %c0_34 = arith.constant 0 : index
    %c0_35 = arith.constant 0 : index
    %28 = vector.load %arg6[%c2_33, %c0_34, %c0_35] : memref<3x128x128xf32, #tpu.memory_space<vmem>>, vector<1x128x128xf32>
    %29 = vector.shape_cast %28 : vector<1x128x128xf32> to vector<128x128xf32>
    %cst_36 = arith.constant dense<0.000000e+00> : vector<16x128xf32>
    %30 = tpu.matmul %27, %29, %cst_36 {dimension_numbers = #tpu.dot_dimension_numbers<[1], [0], [0], [1], [0, 0, 1, 1], [], []>} : vector<16x128xf32>, vector<128x128xf32>, vector<16x128xf32> -> vector<16x128xf32>
    %31 = arith.addf %26, %30 : vector<16x128xf32>
    %c0_37 = arith.constant 0 : index
    %c0_38 = arith.constant 0 : index
    %32 = vector.load %arg8[%c0_37, %c0_38] : memref<1x128xf32, #tpu.memory_space<vmem>>, vector<1x128xf32>
    %33 = vector.broadcast %32 : vector<1x128xf32> to vector<16x128xf32>
    %34 = arith.addf %31, %33 : vector<16x128xf32>
    %35 = vector.shape_cast %34 : vector<16x128xf32> to vector<1x16x128xf32>
    %c0_39 = arith.constant 0 : index
    %c0_40 = arith.constant 0 : index
    %c0_41 = arith.constant 0 : index
    %36 = vector.load %arg9[%c0_39, %c0_40, %c0_41] : memref<1x16x128xf32, #tpu.memory_space<vmem>>, vector<1x16x128xf32>
    tpu.vector_store %arg9[%c0_39, %c0_40, %c0_41], %35 {strides = array<i32>} : memref<1x16x128xf32, #tpu.memory_space<vmem>>, vector<1x16x128xf32>,
    return
  }
  func.func @transform_0(%arg0: i32) -> (i32, i32, i32) {
    %c0_i32 = arith.constant 0 : i32
    %c0_i32_0 = arith.constant 0 : i32
    %c0_i32_1 = arith.constant 0 : i32
    return %arg0, %c0_i32, %c0_i32_0 : i32, i32, i32
  }
  func.func @transform_1(%arg0: i32) -> (i32, i32, i32) {
    %c0_i32 = arith.constant 0 : i32
    %c0_i32_0 = arith.constant 0 : i32
    %c0_i32_1 = arith.constant 0 : i32
    return %arg0, %c0_i32, %c0_i32_0 : i32, i32, i32
  }
  func.func @transform_2(%arg0: i32) -> (i32, i32) {
    %c0_i32 = arith.constant 0 : i32
    %c0_i32_0 = arith.constant 0 : i32
    %c0_i32_1 = arith.constant 0 : i32
    return %c0_i32, %c0_i32_0 : i32, i32
  }
  func.func @transform_3(%arg0: i32) -> (i32, i32) {
    %c0_i32 = arith.constant 0 : i32
    %c0_i32_0 = arith.constant 0 : i32
    %c0_i32_1 = arith.constant 0 : i32
    return %c0_i32, %c0_i32_0 : i32, i32
  }
  func.func @transform_4(%arg0: i32) -> (i32, i32) {
    %c0_i32 = arith.constant 0 : i32
    %c0_i32_0 = arith.constant 0 : i32
    %c0_i32_1 = arith.constant 0 : i32
    return %c0_i32, %c0_i32_0 : i32, i32
  }
  func.func @transform_5(%arg0: i32) -> (i32, i32, i32) {
    %c0_i32 = arith.constant 0 : i32
    %c0_i32_0 = arith.constant 0 : i32
    %c0_i32_1 = arith.constant 0 : i32
    %c0_i32_2 = arith.constant 0 : i32
    return %c0_i32, %c0_i32_0, %c0_i32_1 : i32, i32, i32
  }
  func.func @transform_6(%arg0: i32) -> (i32, i32) {
    %c0_i32 = arith.constant 0 : i32
    %c0_i32_0 = arith.constant 0 : i32
    %c0_i32_1 = arith.constant 0 : i32
    return %c0_i32, %c0_i32_0 : i32, i32
  }
  func.func @transform_7(%arg0: i32) -> (i32, i32) {
    %c0_i32 = arith.constant 0 : i32
    %c0_i32_0 = arith.constant 0 : i32
    %c0_i32_1 = arith.constant 0 : i32
    return %c0_i32, %c0_i32_0 : i32, i32
  }
  func.func @transform_8(%arg0: i32) -> (i32, i32, i32) {
    %c0_i32 = arith.constant 0 : i32
    %c0_i32_0 = arith.constant 0 : i32
    %c0_i32_1 = arith.constant 0 : i32
    return %arg0, %c0_i32, %c0_i32_0 : i32, i32, i32
  }
}

</mosaic_0001>

<llo_original>
// kernel: tile.13
$region0: #{tile.13}
  #allocation0 [shape = 's32[1]{0}', space=sflag, size = 0x4, scoped, tag = 'scoped memory for tile.13']
  %s0 = inlined_call_operand.vmem [shape: f32[8], index: 0, kind: input, shape index: {}]
  %s1 = inlined_call_operand.vmem [shape: f32[16,8], index: 1, kind: output, shape index: {}]
  // Predicated region
  $region2: #{tile.13} parent=0 // pred_check
    _
  $region3: #{tile.13} parent=0 // pred_check_branch
    %3 = sbr.rel (0) target = $region5
  $region4: #{tile.13} parent=0 // pred_region
    _
  $region5: #{tile.13} parent=0 // pred_fallthru
    _
  %v4 = vld [vmem:[%s0] ss:$0 sm:$0xff]
  %5 = vst [vmem:[%s1] sm:$0xff] %v4
  %s6 = scalar_lea.vmem %s1, 8
  %7 = vst [vmem:[%s6] sm:$0xff] %v4

// kernel: tile.14
$region0: #{tile.14}
  %s0 = inlined_call_operand.vmem [shape: f32[16,8], index: 0, kind: input, shape index: {}]
  %s1 = inlined_call_operand.vmem [shape: f32[1,128], index: 1, kind: output, shape index: {}]
  $region1: #{tile.14} parent=0
    #allocation0 [shape = 'u8[4096]{0}', space=vmem, size = 0x1000, scoped, tag = 'scoped mem for output reshape']
    %v2 = vld [vmem:[%s0] sm:$0x1]
    %vm3 = vcmask 64512
    %4 = vst.msk [vmem:[#allocation0] sm:$0x1] %vm3, %v2
    %s5 = scalar_lea.vmem %s0, 15
    %v6 = vld [vmem:[%s5] sm:$0x1]
    %7 = vrot.lane.b32.xlu0 %v6, 120
    %v8 = vpop.permute.xlu0 %7
    %vm9 = vcmask 1048512
    %10 = vst.msk [vmem:[#allocation0] sm:$0x1] %vm9, %v8
    %s11 = scalar_lea.vmem %s0, 14
    %v12 = vld [vmem:[%s11] sm:$0x1]
    %13 = vrot.lane.b32.xlu0 %v12, 112
    %v14 = vpop.permute.xlu0 %13
    %vm15 = vcmask 982912
    %16 = vst.msk [vmem:[#allocation0] sm:$0x1] %vm15, %v14
    %s17 = scalar_lea.vmem %s0, 13
    %v18 = vld [vmem:[%s17] sm:$0x1]
    %19 = vrot.lane.b32.xlu0 %v18, 104
    %v20 = vpop.permute.xlu0 %19
    %vm21 = vcmask 917312
    %22 = vst.msk [vmem:[#allocation0] sm:$0x1] %vm21, %v20
    %s23 = scalar_lea.vmem %s0, 12
    %v24 = vld [vmem:[%s23] sm:$0x1]
    %25 = vrot.lane.b32.xlu0 %v24, 96
    %v26 = vpop.permute.xlu0 %25
    %vm27 = vcmask 851712
    %28 = vst.msk [vmem:[#allocation0] sm:$0x1] %vm27, %v26
    %s29 = scalar_lea.vmem %s0, 11
    %v30 = vld [vmem:[%s29] sm:$0x1]
    %31 = vrot.lane.b32.xlu0 %v30, 88
    %v32 = vpop.permute.xlu0 %31
    %vm33 = vcmask 786112
    %34 = vst.msk [vmem:[#allocation0] sm:$0x1] %vm33, %v32
    %s35 = scalar_lea.vmem %s0, 10
    %v36 = vld [vmem:[%s35] sm:$0x1]
    %37 = vrot.lane.b32.xlu0 %v36, 80
    %v38 = vpop.permute.xlu0 %37
    %vm39 = vcmask 720512
    %40 = vst.msk [vmem:[#allocation0] sm:$0x1] %vm39, %v38
    %s41 = scalar_lea.vmem %s0, 9
    %v42 = vld [vmem:[%s41] sm:$0x1]
    %43 = vrot.lane.b32.xlu0 %v42, 72
    %v44 = vpop.permute.xlu0 %43
    %vm45 = vcmask 654912
    %46 = vst.msk [vmem:[#allocation0] sm:$0x1] %vm45, %v44
    %s47 = scalar_lea.vmem %s0, 8
    %v48 = vld [vmem:[%s47] sm:$0x1]
    %49 = vrot.lane.b32.xlu0 %v48, 64
    %v50 = vpop.permute.xlu0 %49
    %vm51 = vcmask 589312
    %52 = vst.msk [vmem:[#allocation0] sm:$0x1] %vm51, %v50
    %s53 = scalar_lea.vmem %s0, 7
    %v54 = vld [vmem:[%s53] sm:$0x1]
    %55 = vrot.lane.b32.xlu0 %v54, 56
    %v56 = vpop.permute.xlu0 %55
    %vm57 = vcmask 523712
    %58 = vst.msk [vmem:[#allocation0] sm:$0x1] %vm57, %v56
    %s59 = scalar_lea.vmem %s0, 6
    %v60 = vld [vmem:[%s59] sm:$0x1]
    %61 = vrot.lane.b32.xlu0 %v60, 48
    %v62 = vpop.permute.xlu0 %61
    %vm63 = vcmask 458112
    %64 = vst.msk [vmem:[#allocation0] sm:$0x1] %vm63, %v62
    %s65 = scalar_lea.vmem %s0, 5
    %v66 = vld [vmem:[%s65] sm:$0x1]
    %67 = vrot.lane.b32.xlu0 %v66, 40
    %v68 = vpop.permute.xlu0 %67
    %vm69 = vcmask 392512
    %70 = vst.msk [vmem:[#allocation0] sm:$0x1] %vm69, %v68
    %s71 = scalar_lea.vmem %s0, 4
    %v72 = vld [vmem:[%s71] sm:$0x1]
    %73 = vrot.lane.b32.xlu0 %v72, 32
    %v74 = vpop.permute.xlu0 %73
    %vm75 = vcmask 326912
    %76 = vst.msk [vmem:[#allocation0] sm:$0x1] %vm75, %v74
    %s77 = scalar_lea.vmem %s0, 3
    %v78 = vld [vmem:[%s77] sm:$0x1]
    %79 = vrot.lane.b32.xlu0 %v78, 24
    %v80 = vpop.permute.xlu0 %79
    %vm81 = vcmask 261312
    %82 = vst.msk [vmem:[#allocation0] sm:$0x1] %vm81, %v80
    %s83 = scalar_lea.vmem %s0, 2
    %v84 = vld [vmem:[%s83] sm:$0x1]
    %85 = vrot.lane.b32.xlu0 %v84, 16
    %v86 = vpop.permute.xlu0 %85
    %vm87 = vcmask 195712
    %88 = vst.msk [vmem:[#allocation0] sm:$0x1] %vm87, %v86
    %s89 = scalar_lea.vmem %s0, 1
    %v90 = vld [vmem:[%s89] sm:$0x1]
    %91 = vrot.lane.b32.xlu0 %v90, 8
    %v92 = vpop.permute.xlu0 %91
    %vm93 = vcmask 130112
    %94 = vst.msk [vmem:[#allocation0] sm:$0x1] %vm93, %v92
    %s96 = sshllo.u32 0, 1
    %v98 = vld [vmem:[#allocation0] sm:%s96]
    %s99 = sshllo.u32 0, 1
    %100 = vst [vmem:[%s1] sm:%s99] %v98

// kernel: lateral_connect_forward.1
$region0: #{lateral_connect_forward.1}
  #allocation0 [shape = 'u32[]', space=smem, size = 0x4, offset = 0x4, fixed_abs, tag = 'smem constant byte address 0x4 - core index']
  #allocation1 [shape = 'u32[144,128]{1,0:T(1,128)}', space=vmem, size = 0x12000, scoped, tag = 'internal scratch']
  #allocation2 [shape = 'f32[18,128]{1,0:T(8,128)}', space=vmem, size = 0x3000, scoped, tag = 'scratch operand']
  %s0 = inlined_call_operand.vmem [shape: f32[2,16,64], index: 0, kind: input, shape index: {}]
  %s1 = inlined_call_operand.vmem [shape: f32[2,8,64], index: 1, kind: input, shape index: {}]
  %s2 = inlined_call_operand.vmem [shape: f32[16,8], index: 2, kind: input, shape index: {}]
  %s3 = inlined_call_operand.vmem [shape: f32[64,128], index: 3, kind: input, shape index: {}]
  %s4 = inlined_call_operand.vmem [shape: f32[64,128], index: 4, kind: input, shape index: {}]
  %s5 = inlined_call_operand.vmem [shape: f32[3,128,128], index: 5, kind: input, shape index: {}]
  %s6 = inlined_call_operand.vmem [shape: f32[1,128], index: 6, kind: input, shape index: {}]
  %s7 = inlined_call_operand.vmem [shape: f32[1,128], index: 7, kind: input, shape index: {}]
  %s8 = inlined_call_operand.vmem [shape: f32[2,16,128], index: 8, kind: output, shape index: {}]
  %s9 = sld [smem:[#allocation0]]
  $region65: #{lateral_connect_forward.1} parent=0
    _
  %s11 = ssub.s32 1, %s9
  %s12 = scalar_select 0, %s11, %s9
  loop: start=0, step=1, limit=4
  $region2: #{lateral_connect_forward.1} parent=0 // loop_pre_header
    _
  $region3: #{lateral_connect_forward.1} parent=0 // loop_header
    %s14 = sphi 0, %s18
    %p15 = scmp.ge.s32.totalorder %s14, 4
    %s24 = sphi 0, %s26
    %s27 = sphi 0, %s24
    %s28 = sphi 0, %s27
    %s44 = sphi 0, %s28
    %s50 = sphi 0, %s52
    %s53 = sphi 0, %s50
    %s54 = sphi 0, %s53
    %s70 = sphi 0, %s54
    %s74 = sphi 0, %s74
    %s76 = sphi 0, %s74
    %s77 = sphi 0, %s76
    %s91 = sphi 0, %s77
    %s95 = sphi 0, %s95
    %s97 = sphi 0, %s95
    %s98 = sphi 0, %s97
    %s112 = sphi 0, %s98
    %s116 = sphi 0, %s116
    %s118 = sphi 0, %s116
    %s119 = sphi 0, %s118
    %s133 = sphi 0, %s119
    %s137 = sphi 0, %s137
    %s139 = sphi 0, %s137
    %s140 = sphi 0, %s139
    %s154 = sphi 0, %s140
    %s158 = sphi 0, %s158
    %s160 = sphi 0, %s158
    %s161 = sphi 0, %s160
    %s175 = sphi 0, %s161
    %s179 = sphi 0, %s179
    %s181 = sphi 0, %s179
    %s182 = sphi 0, %s181
    %s196 = sphi 0, %s182
    %s202 = sphi 0, %s204
    %s205 = sphi 0, %s202
    %s206 = sphi 0, %s205
    %s222 = sphi 0, %s206
  $region4: #{lateral_connect_forward.1} parent=0 // loop_header_branch
    %17 = sbr.rel (%p15) target = $region8
  $region5: #{lateral_connect_forward.1} parent=0 // loop_body
    %s19 = ssub.s32 %s14, 1
    %s20 = ssub.s32 %s14, 2
    %s21 = sadd.s32 %s14, 1
    %s22 = ssub.s32 %s14, %s21
    %p23 = scmp.eq.s32.totalorder %s22, 0
    %s25 = sadd.s32 %s24, 1
    %s26 = scalar_select %p23, %s24, %s25
    %p29 = pneg %p23
    %p30 = scmp.eq.s32.totalorder %s14, 1
    %p31 = por %p29, %p30
    %p32 = scmp.ne.s32.totalorder %s24, %s27
    %p33 = scmp.eq.s32.totalorder %s14, 0
    %p34 = por %p32, %p33
    %p35 = scmp.ne.s32.totalorder %s24, %s27
    %p36 = scmp.eq.s32.totalorder %s19, 1
    %p37 = por %p35, %p36
    %p38 = scmp.ne.s32.totalorder %s27, %s28
    %p39 = scmp.eq.s32.totalorder %s19, 0
    %p40 = por %p38, %p39
    %p41 = scmp.ne.s32.totalorder %s27, %s28
    %p42 = scmp.eq.s32.totalorder %s20, 1
    %p43 = por %p41, %p42
    %p45 = scmp.ne.s32.totalorder %s28, %s44
    %p46 = scmp.eq.s32.totalorder %s20, 0
    %p47 = por %p45, %p46
    %s48 = ssub.s32 %s14, %s21
    %p49 = scmp.eq.s32.totalorder %s48, 0
    %s51 = sadd.s32 %s50, 1
    %s52 = scalar_select %p49, %s50, %s51
    %p55 = pneg %p49
    %p56 = scmp.eq.s32.totalorder %s14, 1
    %p57 = por %p55, %p56
    %p58 = scmp.ne.s32.totalorder %s50, %s53
    %p59 = scmp.eq.s32.totalorder %s14, 0
    %p60 = por %p58, %p59
    %p61 = scmp.ne.s32.totalorder %s50, %s53
    %p62 = scmp.eq.s32.totalorder %s19, 1
    %p63 = por %p61, %p62
    %p64 = scmp.ne.s32.totalorder %s53, %s54
    %p65 = scmp.eq.s32.totalorder %s19, 0
    %p66 = por %p64, %p65
    %p67 = scmp.ne.s32.totalorder %s53, %s54
    %p68 = scmp.eq.s32.totalorder %s20, 1
    %p69 = por %p67, %p68
    %p71 = scmp.ne.s32.totalorder %s54, %s70
    %p72 = scmp.eq.s32.totalorder %s20, 0
    %p73 = por %p71, %p72
    %s75 = sadd.s32 %s74, 1
    %p78 = scmp.eq.s32.totalorder %s14, 1
    %p79 = scmp.ne.s32.totalorder %s74, %s76
    %p80 = scmp.eq.s32.totalorder %s14, 0
    %p81 = por %p79, %p80
    %p82 = scmp.ne.s32.totalorder %s74, %s76
    %p83 = scmp.eq.s32.totalorder %s19, 1
    %p84 = por %p82, %p83
    %p85 = scmp.ne.s32.totalorder %s76, %s77
    %p86 = scmp.eq.s32.totalorder %s19, 0
    %p87 = por %p85, %p86
    %p88 = scmp.ne.s32.totalorder %s76, %s77
    %p89 = scmp.eq.s32.totalorder %s20, 1
    %p90 = por %p88, %p89
    %p92 = scmp.ne.s32.totalorder %s77, %s91
    %p93 = scmp.eq.s32.totalorder %s20, 0
    %p94 = por %p92, %p93
    %s96 = sadd.s32 %s95, 1
    %p99 = scmp.eq.s32.totalorder %s14, 1
    %p100 = scmp.ne.s32.totalorder %s95, %s97
    %p101 = scmp.eq.s32.totalorder %s14, 0
    %p102 = por %p100, %p101
    %p103 = scmp.ne.s32.totalorder %s95, %s97
    %p104 = scmp.eq.s32.totalorder %s19, 1
    %p105 = por %p103, %p104
    %p106 = scmp.ne.s32.totalorder %s97, %s98
    %p107 = scmp.eq.s32.totalorder %s19, 0
    %p108 = por %p106, %p107
    %p109 = scmp.ne.s32.totalorder %s97, %s98
    %p110 = scmp.eq.s32.totalorder %s20, 1
    %p111 = por %p109, %p110
    %p113 = scmp.ne.s32.totalorder %s98, %s112
    %p114 = scmp.eq.s32.totalorder %s20, 0
    %p115 = por %p113, %p114
    %s117 = sadd.s32 %s116, 1
    %p120 = scmp.eq.s32.totalorder %s14, 1
    %p121 = scmp.ne.s32.totalorder %s116, %s118
    %p122 = scmp.eq.s32.totalorder %s14, 0
    %p123 = por %p121, %p122
    %p124 = scmp.ne.s32.totalorder %s116, %s118
    %p125 = scmp.eq.s32.totalorder %s19, 1
    %p126 = por %p124, %p125
    %p127 = scmp.ne.s32.totalorder %s118, %s119
    %p128 = scmp.eq.s32.totalorder %s19, 0
    %p129 = por %p127, %p128
    %p130 = scmp.ne.s32.totalorder %s118, %s119
    %p131 = scmp.eq.s32.totalorder %s20, 1
    %p132 = por %p130, %p131
    %p134 = scmp.ne.s32.totalorder %s119, %s133
    %p135 = scmp.eq.s32.totalorder %s20, 0
    %p136 = por %p134, %p135
    %s138 = sadd.s32 %s137, 1
    %p141 = scmp.eq.s32.totalorder %s14, 1
    %p142 = scmp.ne.s32.totalorder %s137, %s139
    %p143 = scmp.eq.s32.totalorder %s14, 0
    %p144 = por %p142, %p143
    %p145 = scmp.ne.s32.totalorder %s137, %s139
    %p146 = scmp.eq.s32.totalorder %s19, 1
    %p147 = por %p145, %p146
    %p148 = scmp.ne.s32.totalorder %s139, %s140
    %p149 = scmp.eq.s32.totalorder %s19, 0
    %p150 = por %p148, %p149
    %p151 = scmp.ne.s32.totalorder %s139, %s140
    %p152 = scmp.eq.s32.totalorder %s20, 1
    %p153 = por %p151, %p152
    %p155 = scmp.ne.s32.totalorder %s140, %s154
    %p156 = scmp.eq.s32.totalorder %s20, 0
    %p157 = por %p155, %p156
    %s159 = sadd.s32 %s158, 1
    %p162 = scmp.eq.s32.totalorder %s14, 1
    %p163 = scmp.ne.s32.totalorder %s158, %s160
    %p164 = scmp.eq.s32.totalorder %s14, 0
    %p165 = por %p163, %p164
    %p166 = scmp.ne.s32.totalorder %s158, %s160
    %p167 = scmp.eq.s32.totalorder %s19, 1
    %p168 = por %p166, %p167
    %p169 = scmp.ne.s32.totalorder %s160, %s161
    %p170 = scmp.eq.s32.totalorder %s19, 0
    %p171 = por %p169, %p170
    %p172 = scmp.ne.s32.totalorder %s160, %s161
    %p173 = scmp.eq.s32.totalorder %s20, 1
    %p174 = por %p172, %p173
    %p176 = scmp.ne.s32.totalorder %s161, %s175
    %p177 = scmp.eq.s32.totalorder %s20, 0
    %p178 = por %p176, %p177
    %s180 = sadd.s32 %s179, 1
    %p183 = scmp.eq.s32.totalorder %s14, 1
    %p184 = scmp.ne.s32.totalorder %s179, %s181
    %p185 = scmp.eq.s32.totalorder %s14, 0
    %p186 = por %p184, %p185
    %p187 = scmp.ne.s32.totalorder %s179, %s181
    %p188 = scmp.eq.s32.totalorder %s19, 1
    %p189 = por %p187, %p188
    %p190 = scmp.ne.s32.totalorder %s181, %s182
    %p191 = scmp.eq.s32.totalorder %s19, 0
    %p192 = por %p190, %p191
    %p193 = scmp.ne.s32.totalorder %s181, %s182
    %p194 = scmp.eq.s32.totalorder %s20, 1
    %p195 = por %p193, %p194
    %p197 = scmp.ne.s32.totalorder %s182, %s196
    %p198 = scmp.eq.s32.totalorder %s20, 0
    %p199 = por %p197, %p198
    %s200 = ssub.s32 %s14, %s21
    %p201 = scmp.eq.s32.totalorder %s200, 0
    %s203 = sadd.s32 %s202, 1
    %s204 = scalar_select %p201, %s202, %s203
    %p207 = pneg %p201
    %p208 = scmp.eq.s32.totalorder %s14, 1
    %p209 = por %p207, %p208
    %p210 = scmp.ne.s32.totalorder %s202, %s205
    %p211 = scmp.eq.s32.totalorder %s14, 0
    %p212 = por %p210, %p211
    %p213 = scmp.ne.s32.totalorder %s202, %s205
    %p214 = scmp.eq.s32.totalorder %s19, 1
    %p215 = por %p213, %p214
    %p216 = scmp.ne.s32.totalorder %s205, %s206
    %p217 = scmp.eq.s32.totalorder %s19, 0
    %p218 = por %p216, %p217
    %p219 = scmp.ne.s32.totalorder %s205, %s206
    %p220 = scmp.eq.s32.totalorder %s20, 1
    %p221 = por %p219, %p220
    %p223 = scmp.ne.s32.totalorder %s206, %s222
    %p224 = scmp.eq.s32.totalorder %s20, 0
    %p225 = por %p223, %p224
    %p226 = scmp.le.s32.totalorder 1, %s14
    %p227 = scmp.lt.s32.totalorder %s14, 3
    %p228 = pnand %p226, %p227
    %p229 = pneg %p228
    // Predicated region
    $region9: #{lateral_connect_forward.1} parent=5 // pred_check
      _
    $region10: #{lateral_connect_forward.1} parent=5 // pred_check_branch
      %231 = sbr.rel (%p228) target = $region12
    $region11: #{lateral_connect_forward.1} parent=5 // pred_region
      %s232 = ssub.s32 %s14, 1
      // Predicated region
      $region13: #{lateral_connect_forward.1} parent=11 // pred_check
        %p233 = pneg %p87
      $region14: #{lateral_connect_forward.1} parent=11 // pred_check_branch
        %235 = sbr.rel (%p233) target = $region16
      $region15: #{lateral_connect_forward.1} parent=11 // pred_region
        _
      $region16: #{lateral_connect_forward.1} parent=11 // pred_fallthru
        _
      // Predicated region
      $region17: #{lateral_connect_forward.1} parent=11 // pred_check
        %p236 = pneg %p108
      $region18: #{lateral_connect_forward.1} parent=11 // pred_check_branch
        %238 = sbr.rel (%p236) target = $region20
      $region19: #{lateral_connect_forward.1} parent=11 // pred_region
        _
      $region20: #{lateral_connect_forward.1} parent=11 // pred_fallthru
        _
      // Predicated region
      $region21: #{lateral_connect_forward.1} parent=11 // pred_check
        %p239 = pneg %p129
      $region22: #{lateral_connect_forward.1} parent=11 // pred_check_branch
        %241 = sbr.rel (%p239) target = $region24
      $region23: #{lateral_connect_forward.1} parent=11 // pred_region
        _
      $region24: #{lateral_connect_forward.1} parent=11 // pred_fallthru
        _
      // Predicated region
      $region25: #{lateral_connect_forward.1} parent=11 // pred_check
        %p242 = pneg %p150
      $region26: #{lateral_connect_forward.1} parent=11 // pred_check_branch
        %244 = sbr.rel (%p242) target = $region28
      $region27: #{lateral_connect_forward.1} parent=11 // pred_region
        _
      $region28: #{lateral_connect_forward.1} parent=11 // pred_fallthru
        _
      // Predicated region
      $region29: #{lateral_connect_forward.1} parent=11 // pred_check
        %p245 = pneg %p171
      $region30: #{lateral_connect_forward.1} parent=11 // pred_check_branch
        %247 = sbr.rel (%p245) target = $region32
      $region31: #{lateral_connect_forward.1} parent=11 // pred_region
        _
      $region32: #{lateral_connect_forward.1} parent=11 // pred_fallthru
        _
      // Predicated region
      $region33: #{lateral_connect_forward.1} parent=11 // pred_check
        %p248 = pneg %p192
      $region34: #{lateral_connect_forward.1} parent=11 // pred_check_branch
        %250 = sbr.rel (%p248) target = $region36
      $region35: #{lateral_connect_forward.1} parent=11 // pred_region
        _
      $region36: #{lateral_connect_forward.1} parent=11 // pred_fallthru
        _
    $region12: #{lateral_connect_forward.1} parent=5 // pred_fallthru
      _
    %p251 = scmp.lt.s32.totalorder %s14, 2
    // Predicated region
    $region37: #{lateral_connect_forward.1} parent=5 // pred_check
      %p252 = pneg %p251
    $region38: #{lateral_connect_forward.1} parent=5 // pred_check_branch
      %254 = sbr.rel (%p252) target = $region40
    $region39: #{lateral_connect_forward.1} parent=5 // pred_region
      // Predicated region
      $region41: #{lateral_connect_forward.1} parent=39 // pred_check
        %p255 = pneg %p34
      $region42: #{lateral_connect_forward.1} parent=39 // pred_check_branch
        %257 = sbr.rel (%p255) target = $region44
      $region43: #{lateral_connect_forward.1} parent=39 // pred_region
        %p258 = scmp.lt.s32.totalorder %s14, 1
        %s259 = scalar_select %p258, %s14, 1
        %s260 = smul.addr %s259, 2
        %s261 = smul.addr %s260, 8
        %s262 = scalar_lea.vmem %s0, %s261
      $region44: #{lateral_connect_forward.1} parent=39 // pred_fallthru
        _
      // Predicated region
      $region45: #{lateral_connect_forward.1} parent=39 // pred_check
        %p263 = pneg %p60
      $region46: #{lateral_connect_forward.1} parent=39 // pred_check_branch
        %265 = sbr.rel (%p263) target = $region48
      $region47: #{lateral_connect_forward.1} parent=39 // pred_region
        %p266 = scmp.lt.s32.totalorder %s14, 1
        %s267 = scalar_select %p266, %s14, 1
        %s268 = smul.addr %s267, 8
        %s269 = scalar_lea.vmem %s1, %s268
      $region48: #{lateral_connect_forward.1} parent=39 // pred_fallthru
        _
    $region40: #{lateral_connect_forward.1} parent=5 // pred_fallthru
      _
    %p270 = scmp.le.s32.totalorder 1, %s14
    %p271 = scmp.lt.s32.totalorder %s14, 3
    %p272 = pnand %p270, %p271
    %p273 = pneg %p272
    // Predicated region
    $region49: #{lateral_connect_forward.1} parent=5 // pred_check
      _
    $region50: #{lateral_connect_forward.1} parent=5 // pred_check_branch
      %275 = sbr.rel (%p272) target = $region52
    $region51: #{lateral_connect_forward.1} parent=5 // pred_region
      %s276 = ssub.s32 %s14, 1
      %p277 = scmp.lt.s32.totalorder %s19, 1
      %s278 = scalar_select %p277, %s19, 1
      %s279 = smul.addr %s278, 2
      %s280 = smul.addr %s279, 8
      %s281 = scalar_lea.vmem %s0, %s280
      %p282 = pneg %p40
      %p283 = pneg %p37
      %p284 = scmp.lt.s32.totalorder %s19, 1
      %s285 = scalar_select %p284, %s19, 1
      %s286 = smul.addr %s285, 8
      %s287 = scalar_lea.vmem %s1, %s286
      %p288 = pneg %p66
      %p289 = pneg %p63
      %p290 = pneg %p87
      %p291 = pneg %p84
      %p292 = pneg %p108
      %p293 = pneg %p105
      %p294 = pneg %p129
      %p295 = pneg %p126
      %p296 = pneg %p150
      %p297 = pneg %p147
      %p298 = pneg %p171
      %p299 = pneg %p168
      %p300 = pneg %p192
      %p301 = pneg %p189
      %p302 = pneg %p218
      %p303 = pneg %p215
      %p304 = scmp.lt.s32.totalorder %s19, 1
      %s305 = scalar_select %p304, %s19, 1
      %s306 = smul.addr %s305, 2
      %s307 = smul.addr %s306, 8
      %s308 = scalar_lea.vmem %s8, %s307
      %p309 = scmp.lt.s32.totalorder %s19, 1
      %s310 = scalar_select %p309, %s19, 1
      %s311 = smul.addr %s310, 2
      %s312 = smul.addr %s311, 8
      %s313 = scalar_lea.vmem %s0, %s312
      %p314 = scmp.lt.s32.totalorder %s19, 1
      %s315 = scalar_select %p314, %s19, 1
      %s316 = smul.addr %s315, 8
      %s317 = scalar_lea.vmem %s1, %s316
      %p318 = scmp.lt.s32.totalorder %s19, 1
      %s319 = scalar_select %p318, %s19, 1
      %s320 = smul.addr %s319, 2
      %s321 = smul.addr %s320, 8
      %s322 = scalar_lea.vmem %s8, %s321
      %v323 = vld [vmem:[%s313] sm:$0xff]
      %v324 = vld [vmem:[%s313 + $0x8] sm:$0xff]
      %v325 = vld [vmem:[%s3] sm:$0xff]
      %v326 = vld [vmem:[%s3 + $0x8] sm:$0xff]
      %v327 = vld [vmem:[%s3 + $0x10] sm:$0xff]
      %v328 = vld [vmem:[%s3 + $0x18] sm:$0xff]
      %v329 = vld [vmem:[%s3 + $0x20] sm:$0xff]
      %v330 = vld [vmem:[%s3 + $0x28] sm:$0xff]
      %v331 = vld [vmem:[%s3 + $0x30] sm:$0xff]
      %v332 = vld [vmem:[%s3 + $0x38] sm:$0xff]
      %v333 = vld [vmem:[%s2] sm:$0xff]
      %v334 = vld [vmem:[%s2 + $0x8] sm:$0xff]
      %v335 = vld [vmem:[%s317] sm:$0xff]
      %vm336 = vcmask 64512
      %v338 = vsel %vm336, %v333, 0
      %v341 = vsel %vm336, %v334, 0
      %343 = vmatprep.subr.mxu0 0.0
      %344 = vmatpush1.msra.mxu0 %v335
      %345 = vmatprep.subr.mxu0 0.0
      %346 = vmatpush1.msra.mxu0 0.0
      %347 = vmatprep.subr.mxu0 0.0
      %348 = vmatpush1.msra.mxu0 0.0
      %349 = vmatprep.subr.mxu0 0.0
      %350 = vmatpush1.msra.mxu0 0.0
      %351 = vmatprep.subr.mxu0 0.0
      %352 = vmatpush1.msra.mxu0 0.0
      %353 = vmatprep.subr.mxu0 0.0
      %354 = vmatpush1.msra.mxu0 0.0
      %355 = vmatprep.subr.mxu0 0.0
      %356 = vmatpush1.msra.mxu0 0.0
      %357 = vmatprep.subr.mxu0 0.0
      %358 = vmatpush1.msra.mxu0 0.0
      %359 = vmatprep.subr.mxu0 0.0
      %360 = vmatpush1.msra.mxu0 0.0
      %361 = vmatprep.subr.mxu0 0.0
      %362 = vmatpush1.msra.mxu0 0.0
      %363 = vmatprep.subr.mxu0 0.0
      %364 = vmatpush1.msra.mxu0 0.0
      %365 = vmatprep.subr.mxu0 0.0
      %366 = vmatpush1.msra.mxu0 0.0
      %367 = vmatprep.subr.mxu0 0.0
      %368 = vmatpush1.msra.mxu0 0.0
      %369 = vmatprep.subr.mxu0 0.0
      %370 = vmatpush1.msra.mxu0 0.0
      %371 = vmatprep.subr.mxu0 0.0
      %372 = vmatpush1.msra.mxu0 0.0
      %373 = vmatprep.subr.mxu0 0.0
      %374 = vmatpush1.msra.mxu0 0.0
      %375 = vmatprep.subr.mxu0 0.0
      %376 = vmatpush1.msra.mxu0 0.0
      %377 = vmatprep.subr.mxu0 0.0
      %378 = vmatpush1.msra.mxu0 0.0
      %379 = vmatprep.subr.mxu0 0.0
      %380 = vmatpush1.msra.mxu0 0.0
      %381 = vmatprep.subr.mxu0 0.0
      %382 = vmatpush1.msra.mxu0 0.0
      %383 = vmatprep.subr.mxu0 0.0
      %384 = vmatpush1.msra.mxu0 0.0
      %385 = vmatprep.subr.mxu0 0.0
      %386 = vmatpush1.msra.mxu0 0.0
      %387 = vmatprep.subr.mxu0 0.0
      %388 = vmatpush1.msra.mxu0 0.0
      %389 = vmatprep.subr.mxu0 0.0
      %390 = vmatpush1.msra.mxu0 0.0
      %391 = vmatprep.subr.mxu0 0.0
      %392 = vmatpush1.msra.mxu0 0.0
      %393 = vmatprep.subr.mxu0 0.0
      %394 = vmatpush1.msra.mxu0 0.0
      %395 = vmatprep.subr.mxu0 0.0
      %396 = vmatpush1.msra.mxu0 0.0
      %397 = vmatprep.subr.mxu0 0.0
      %398 = vmatpush1.msra.mxu0 0.0
      %399 = vmatprep.subr.mxu0 0.0
      %400 = vmatpush1.msra.mxu0 0.0
      %401 = vmatprep.subr.mxu0 0.0
      %402 = vmatpush1.msra.mxu0 0.0
      %403 = vmatprep.subr.mxu0 0.0
      %404 = vmatpush1.msra.mxu0 0.0
      %405 = vmatprep.subr.mxu0 0.0
      %406 = vmatpush1.msra.mxu0 0.0
      %407 = vmatprep.mubr.f32.mxu0 0.0
      %408 = vmatmul.mubr.f32.gmra.mrb[0].mxu0 %v338
      %v409 = vpop.f32.mrb[0].mxu0
      %v410 = vadd.f32 0.0, %v409
      %v411 = vpop.f32.mrb[0].mxu0
      %412 = vmatprep.mubr.f32.mxu0 0.0
      %413 = vmatmul.mubr.f32.gmra.mrb[0].mxu0 %v341
      %v414 = vpop.f32.mrb[0].mxu0
      %v415 = vadd.f32 0.0, %v414
      %v416 = vpop.f32.mrb[0].mxu0
      %417 = vdwg.mxu0
      %v418 = vld [vmem:[%s4] sm:$0xff]
      %v419 = vld [vmem:[%s4 + $0x8] sm:$0xff]
      %v420 = vld [vmem:[%s4 + $0x10] sm:$0xff]
      %v421 = vld [vmem:[%s4 + $0x18] sm:$0xff]
      %v422 = vld [vmem:[%s4 + $0x20] sm:$0xff]
      %v423 = vld [vmem:[%s4 + $0x28] sm:$0xff]
      %v424 = vld [vmem:[%s4 + $0x30] sm:$0xff]
      %v425 = vld [vmem:[%s4 + $0x38] sm:$0xff]
      %vm426 = vcmask 523264
      %v428 = vsel %vm426, %v410, 0
      %v431 = vsel %vm426, %v415, 0
      %433 = vmatprep.subr.mxu0 0.0
      %434 = vmatpush1.msra.mxu0 %v418
      %435 = vmatprep.subr.mxu0 0.0
      %436 = vmatpush1.msra.mxu0 %v419
      %437 = vmatprep.subr.mxu0 0.0
      %438 = vmatpush1.msra.mxu0 %v420
      %439 = vmatprep.subr.mxu0 0.0
      %440 = vmatpush1.msra.mxu0 %v421
      %441 = vmatprep.subr.mxu0 0.0
      %442 = vmatpush1.msra.mxu0 %v422
      %443 = vmatprep.subr.mxu0 0.0
      %444 = vmatpush1.msra.mxu0 %v423
      %445 = vmatprep.subr.mxu0 0.0
      %446 = vmatpush1.msra.mxu0 %v424
      %447 = vmatprep.subr.mxu0 0.0
      %448 = vmatpush1.msra.mxu0 %v425
      %449 = vmatprep.subr.mxu0 0.0
      %450 = vmatpush1.msra.mxu0 0.0
      %451 = vmatprep.subr.mxu0 0.0
      %452 = vmatpush1.msra.mxu0 0.0
      %453 = vmatprep.subr.mxu0 0.0
      %454 = vmatpush1.msra.mxu0 0.0
      %455 = vmatprep.subr.mxu0 0.0
      %456 = vmatpush1.msra.mxu0 0.0
      %457 = vmatprep.subr.mxu0 0.0
      %458 = vmatpush1.msra.mxu0 0.0
      %459 = vmatprep.subr.mxu0 0.0
      %460 = vmatpush1.msra.mxu0 0.0
      %461 = vmatprep.subr.mxu0 0.0
      %462 = vmatpush1.msra.mxu0 0.0
      %463 = vmatprep.subr.mxu0 0.0
      %464 = vmatpush1.msra.mxu0 0.0
      %465 = vmatprep.subr.mxu0 0.0
      %466 = vmatpush1.msra.mxu0 0.0
      %467 = vmatprep.subr.mxu0 0.0
      %468 = vmatpush1.msra.mxu0 0.0
      %469 = vmatprep.subr.mxu0 0.0
      %470 = vmatpush1.msra.mxu0 0.0
      %471 = vmatprep.subr.mxu0 0.0
      %472 = vmatpush1.msra.mxu0 0.0
      %473 = vmatprep.subr.mxu0 0.0
      %474 = vmatpush1.msra.mxu0 0.0
      %475 = vmatprep.subr.mxu0 0.0
      %476 = vmatpush1.msra.mxu0 0.0
      %477 = vmatprep.subr.mxu0 0.0
      %478 = vmatpush1.msra.mxu0 0.0
      %479 = vmatprep.subr.mxu0 0.0
      %480 = vmatpush1.msra.mxu0 0.0
      %481 = vmatprep.subr.mxu0 0.0
      %482 = vmatpush1.msra.mxu0 0.0
      %483 = vmatprep.subr.mxu0 0.0
      %484 = vmatpush1.msra.mxu0 0.0
      %485 = vmatprep.subr.mxu0 0.0
      %486 = vmatpush1.msra.mxu0 0.0
      %487 = vmatprep.subr.mxu0 0.0
      %488 = vmatpush1.msra.mxu0 0.0
      %489 = vmatprep.subr.mxu0 0.0
      %490 = vmatpush1.msra.mxu0 0.0
      %491 = vmatprep.subr.mxu0 0.0
      %492 = vmatpush1.msra.mxu0 0.0
      %493 = vmatprep.subr.mxu0 0.0
      %494 = vmatpush1.msra.mxu0 0.0
      %495 = vmatprep.subr.mxu0 0.0
      %496 = vmatpush1.msra.mxu0 0.0
      %497 = vmatprep.mubr.f32.mxu0 0.0
      %498 = vmatmul.mubr.f32.gmra.mrb[0].mxu0 %v428
      %v499 = vpop.f32.mrb[0].mxu0
      %v500 = vadd.f32 0.0, %v499
      %v501 = vpop.f32.mrb[0].mxu0
      %502 = vmatprep.mubr.f32.mxu0 0.0
      %503 = vmatmul.mubr.f32.gmra.mrb[0].mxu0 %v431
      %v504 = vpop.f32.mrb[0].mxu0
      %v505 = vadd.f32 0.0, %v504
      %v506 = vpop.f32.mrb[0].mxu0
      %507 = vdwg.mxu0
      %v509 = vsel %vm426, %v323, 0
      %v512 = vsel %vm426, %v324, 0
      %514 = vmatprep.subr.mxu0 0.0
      %515 = vmatpush1.msra.mxu0 %v325
      %516 = vmatprep.subr.mxu0 0.0
      %517 = vmatpush1.msra.mxu0 %v326
      %518 = vmatprep.subr.mxu0 0.0
      %519 = vmatpush1.msra.mxu0 %v327
      %520 = vmatprep.subr.mxu0 0.0
      %521 = vmatpush1.msra.mxu0 %v328
      %522 = vmatprep.subr.mxu0 0.0
      %523 = vmatpush1.msra.mxu0 %v329
      %524 = vmatprep.subr.mxu0 0.0
      %525 = vmatpush1.msra.mxu0 %v330
      %526 = vmatprep.subr.mxu0 0.0
      %527 = vmatpush1.msra.mxu0 %v331
      %528 = vmatprep.subr.mxu0 0.0
      %529 = vmatpush1.msra.mxu0 %v332
      %530 = vmatprep.subr.mxu0 0.0
      %531 = vmatpush1.msra.mxu0 0.0
      %532 = vmatprep.subr.mxu0 0.0
      %533 = vmatpush1.msra.mxu0 0.0
      %534 = vmatprep.subr.mxu0 0.0
      %535 = vmatpush1.msra.mxu0 0.0
      %536 = vmatprep.subr.mxu0 0.0
      %537 = vmatpush1.msra.mxu0 0.0
      %538 = vmatprep.subr.mxu0 0.0
      %539 = vmatpush1.msra.mxu0 0.0
      %540 = vmatprep.subr.mxu0 0.0
      %541 = vmatpush1.msra.mxu0 0.0
      %542 = vmatprep.subr.mxu0 0.0
      %543 = vmatpush1.msra.mxu0 0.0
      %544 = vmatprep.subr.mxu0 0.0
      %545 = vmatpush1.msra.mxu0 0.0
      %546 = vmatprep.subr.mxu0 0.0
      %547 = vmatpush1.msra.mxu0 0.0
      %548 = vmatprep.subr.mxu0 0.0
      %549 = vmatpush1.msra.mxu0 0.0
      %550 = vmatprep.subr.mxu0 0.0
      %551 = vmatpush1.msra.mxu0 0.0
      %552 = vmatprep.subr.mxu0 0.0
      %553 = vmatpush1.msra.mxu0 0.0
      %554 = vmatprep.subr.mxu0 0.0
      %555 = vmatpush1.msra.mxu0 0.0
      %556 = vmatprep.subr.mxu0 0.0
      %557 = vmatpush1.msra.mxu0 0.0
      %558 = vmatprep.subr.mxu0 0.0
      %559 = vmatpush1.msra.mxu0 0.0
      %560 = vmatprep.subr.mxu0 0.0
      %561 = vmatpush1.msra.mxu0 0.0
      %562 = vmatprep.subr.mxu0 0.0
      %563 = vmatpush1.msra.mxu0 0.0
      %564 = vmatprep.subr.mxu0 0.0
      %565 = vmatpush1.msra.mxu0 0.0
      %566 = vmatprep.subr.mxu0 0.0
      %567 = vmatpush1.msra.mxu0 0.0
      %568 = vmatprep.subr.mxu0 0.0
      %569 = vmatpush1.msra.mxu0 0.0
      %570 = vmatprep.subr.mxu0 0.0
      %571 = vmatpush1.msra.mxu0 0.0
      %572 = vmatprep.subr.mxu0 0.0
      %573 = vmatpush1.msra.mxu0 0.0
      %574 = vmatprep.subr.mxu0 0.0
      %575 = vmatpush1.msra.mxu0 0.0
      %576 = vmatprep.subr.mxu0 0.0
      %577 = vmatpush1.msra.mxu0 0.0
      %578 = vmatprep.mubr.f32.mxu0 0.0
      %579 = vmatmul.mubr.f32.gmra.mrb[0].mxu0 %v509
      %v580 = vpop.f32.mrb[0].mxu0
      %v581 = vadd.f32 %v500, %v580
      %v582 = vpop.f32.mrb[0].mxu0
      %583 = vmatprep.mubr.f32.mxu0 0.0
      %584 = vmatmul.mubr.f32.gmra.mrb[0].mxu0 %v512
      %v585 = vpop.f32.mrb[0].mxu0
      %v586 = vadd.f32 %v505, %v585
      %v587 = vpop.f32.mrb[0].mxu0
      %588 = vdwg.mxu0
      %v589 = vld [vmem:[%s6] sm:$0x1]
      %v591 = vlaneseq
      %v592 = vshrl.u32 %v591, 7
      %v593 = vsub.s32 0, %v592
      %v594 = vrot.slane %v589, %v593
      %v596 = vadd.f32 %v581, %v594
      %v597 = vadd.f32 %v586, %v594
      %598 = vst [vmem:[#allocation2] sm:$0x1] 0.0
      %599 = vst [vmem:[#allocation2 + $0x11] sm:$0x1] 0.0
      %600 = vst [vmem:[#allocation2 + $0x1] sm:$0xff] %v596
      %601 = vst [vmem:[#allocation2 + $0x9] sm:$0xff] %v597
      %v602 = vld [vmem:[#allocation2] sm:$0xff]
      %v603 = vld [vmem:[#allocation2 + $0x8] sm:$0xff]
      %v604 = vld [vmem:[%s5] sm:$0xff]
      %v605 = vld [vmem:[%s5 + $0x8] sm:$0xff]
      %v606 = vld [vmem:[%s5 + $0x10] sm:$0xff]
      %v607 = vld [vmem:[%s5 + $0x18] sm:$0xff]
      %v608 = vld [vmem:[%s5 + $0x20] sm:$0xff]
      %v609 = vld [vmem:[%s5 + $0x28] sm:$0xff]
      %v610 = vld [vmem:[%s5 + $0x30] sm:$0xff]
      %v611 = vld [vmem:[%s5 + $0x38] sm:$0xff]
      %v612 = vld [vmem:[%s5 + $0x40] sm:$0xff]
      %v613 = vld [vmem:[%s5 + $0x48] sm:$0xff]
      %v614 = vld [vmem:[%s5 + $0x50] sm:$0xff]
      %v615 = vld [vmem:[%s5 + $0x58] sm:$0xff]
      %v616 = vld [vmem:[%s5 + $0x60] sm:$0xff]
      %v617 = vld [vmem:[%s5 + $0x68] sm:$0xff]
      %v618 = vld [vmem:[%s5 + $0x70] sm:$0xff]
      %v619 = vld [vmem:[%s5 + $0x78] sm:$0xff]
      %v620 = vld [vmem:[#allocation2 + $0x1] sm:$0xff]
      %v621 = vld [vmem:[#allocation2 + $0x9] sm:$0xff]
      %s622 = scalar_lea.vmem %s5, 128
      %v623 = vld [vmem:[%s622] sm:$0xff]
      %v624 = vld [vmem:[%s622 + $0x8] sm:$0xff]
      %v625 = vld [vmem:[%s622 + $0x10] sm:$0xff]
      %v626 = vld [vmem:[%s622 + $0x18] sm:$0xff]
      %v627 = vld [vmem:[%s622 + $0x20] sm:$0xff]
      %v628 = vld [vmem:[%s622 + $0x28] sm:$0xff]
      %v629 = vld [vmem:[%s622 + $0x30] sm:$0xff]
      %v630 = vld [vmem:[%s622 + $0x38] sm:$0xff]
      %v631 = vld [vmem:[%s622 + $0x40] sm:$0xff]
      %v632 = vld [vmem:[%s622 + $0x48] sm:$0xff]
      %v633 = vld [vmem:[%s622 + $0x50] sm:$0xff]
      %v634 = vld [vmem:[%s622 + $0x58] sm:$0xff]
      %v635 = vld [vmem:[%s622 + $0x60] sm:$0xff]
      %v636 = vld [vmem:[%s622 + $0x68] sm:$0xff]
      %v637 = vld [vmem:[%s622 + $0x70] sm:$0xff]
      %v638 = vld [vmem:[%s622 + $0x78] sm:$0xff]
      %639 = vmatprep.subr.mxu0 0.0
      %640 = vmatpush1.msra.mxu0 %v623
      %641 = vmatprep.subr.mxu0 0.0
      %642 = vmatpush1.msra.mxu0 %v624
      %643 = vmatprep.subr.mxu0 0.0
      %644 = vmatpush1.msra.mxu0 %v625
      %645 = vmatprep.subr.mxu0 0.0
      %646 = vmatpush1.msra.mxu0 %v626
      %647 = vmatprep.subr.mxu0 0.0
      %648 = vmatpush1.msra.mxu0 %v627
      %649 = vmatprep.subr.mxu0 0.0
      %650 = vmatpush1.msra.mxu0 %v628
      %651 = vmatprep.subr.mxu0 0.0
      %652 = vmatpush1.msra.mxu0 %v629
      %653 = vmatprep.subr.mxu0 0.0
      %654 = vmatpush1.msra.mxu0 %v630
      %655 = vmatprep.subr.mxu0 0.0
      %656 = vmatpush1.msra.mxu0 %v631
      %657 = vmatprep.subr.mxu0 0.0
      %658 = vmatpush1.msra.mxu0 %v632
      %659 = vmatprep.subr.mxu0 0.0
      %660 = vmatpush1.msra.mxu0 %v633
      %661 = vmatprep.subr.mxu0 0.0
      %662 = vmatpush1.msra.mxu0 %v634
      %663 = vmatprep.subr.mxu0 0.0
      %664 = vmatpush1.msra.mxu0 %v635
      %665 = vmatprep.subr.mxu0 0.0
      %666 = vmatpush1.msra.mxu0 %v636
      %667 = vmatprep.subr.mxu0 0.0
      %668 = vmatpush1.msra.mxu0 %v637
      %669 = vmatprep.subr.mxu0 0.0
      %670 = vmatpush1.msra.mxu0 %v638
      %671 = vmatprep.subr.mxu0 0.0
      %672 = vmatpush1.msra.mxu0 0.0
      %673 = vmatprep.subr.mxu0 0.0
      %674 = vmatpush1.msra.mxu0 0.0
      %675 = vmatprep.subr.mxu0 0.0
      %676 = vmatpush1.msra.mxu0 0.0
      %677 = vmatprep.subr.mxu0 0.0
      %678 = vmatpush1.msra.mxu0 0.0
      %679 = vmatprep.subr.mxu0 0.0
      %680 = vmatpush1.msra.mxu0 0.0
      %681 = vmatprep.subr.mxu0 0.0
      %682 = vmatpush1.msra.mxu0 0.0
      %683 = vmatprep.subr.mxu0 0.0
      %684 = vmatpush1.msra.mxu0 0.0
      %685 = vmatprep.subr.mxu0 0.0
      %686 = vmatpush1.msra.mxu0 0.0
      %687 = vmatprep.subr.mxu0 0.0
      %688 = vmatpush1.msra.mxu0 0.0
      %689 = vmatprep.subr.mxu0 0.0
      %690 = vmatpush1.msra.mxu0 0.0
      %691 = vmatprep.subr.mxu0 0.0
      %692 = vmatpush1.msra.mxu0 0.0
      %693 = vmatprep.subr.mxu0 0.0
      %694 = vmatpush1.msra.mxu0 0.0
      %695 = vmatprep.subr.mxu0 0.0
      %696 = vmatpush1.msra.mxu0 0.0
      %697 = vmatprep.subr.mxu0 0.0
      %698 = vmatpush1.msra.mxu0 0.0
      %699 = vmatprep.subr.mxu0 0.0
      %700 = vmatpush1.msra.mxu0 0.0
      %701 = vmatprep.subr.mxu0 0.0
      %702 = vmatpush1.msra.mxu0 0.0
      %703 = vmatprep.mubr.f32.mxu0 0.0
      %704 = vmatmul.mubr.f32.gmra.mrb[0].mxu0 %v620
      %v705 = vpop.f32.mrb[0].mxu0
      %v706 = vadd.f32 0.0, %v705
      %v707 = vpop.f32.mrb[0].mxu0
      %708 = vmatprep.mubr.f32.mxu0 0.0
      %709 = vmatmul.mubr.f32.gmra.mrb[0].mxu0 %v621
      %v710 = vpop.f32.mrb[0].mxu0
      %v711 = vadd.f32 0.0, %v710
      %v712 = vpop.f32.mrb[0].mxu0
      %713 = vdwg.mxu0
      %714 = vmatprep.subr.mxu0 0.0
      %715 = vmatpush1.msra.mxu0 %v604
      %716 = vmatprep.subr.mxu0 0.0
      %717 = vmatpush1.msra.mxu0 %v605
      %718 = vmatprep.subr.mxu0 0.0
      %719 = vmatpush1.msra.mxu0 %v606
      %720 = vmatprep.subr.mxu0 0.0
      %721 = vmatpush1.msra.mxu0 %v607
      %722 = vmatprep.subr.mxu0 0.0
      %723 = vmatpush1.msra.mxu0 %v608
      %724 = vmatprep.subr.mxu0 0.0
      %725 = vmatpush1.msra.mxu0 %v609
      %726 = vmatprep.subr.mxu0 0.0
      %727 = vmatpush1.msra.mxu0 %v610
      %728 = vmatprep.subr.mxu0 0.0
      %729 = vmatpush1.msra.mxu0 %v611
      %730 = vmatprep.subr.mxu0 0.0
      %731 = vmatpush1.msra.mxu0 %v612
      %732 = vmatprep.subr.mxu0 0.0
      %733 = vmatpush1.msra.mxu0 %v613
      %734 = vmatprep.subr.mxu0 0.0
      %735 = vmatpush1.msra.mxu0 %v614
      %736 = vmatprep.subr.mxu0 0.0
      %737 = vmatpush1.msra.mxu0 %v615
      %738 = vmatprep.subr.mxu0 0.0
      %739 = vmatpush1.msra.mxu0 %v616
      %740 = vmatprep.subr.mxu0 0.0
      %741 = vmatpush1.msra.mxu0 %v617
      %742 = vmatprep.subr.mxu0 0.0
      %743 = vmatpush1.msra.mxu0 %v618
      %744 = vmatprep.subr.mxu0 0.0
      %745 = vmatpush1.msra.mxu0 %v619
      %746 = vmatprep.subr.mxu0 0.0
      %747 = vmatpush1.msra.mxu0 0.0
      %748 = vmatprep.subr.mxu0 0.0
      %749 = vmatpush1.msra.mxu0 0.0
      %750 = vmatprep.subr.mxu0 0.0
      %751 = vmatpush1.msra.mxu0 0.0
      %752 = vmatprep.subr.mxu0 0.0
      %753 = vmatpush1.msra.mxu0 0.0
      %754 = vmatprep.subr.mxu0 0.0
      %755 = vmatpush1.msra.mxu0 0.0
      %756 = vmatprep.subr.mxu0 0.0
      %757 = vmatpush1.msra.mxu0 0.0
      %758 = vmatprep.subr.mxu0 0.0
      %759 = vmatpush1.msra.mxu0 0.0
      %760 = vmatprep.subr.mxu0 0.0
      %761 = vmatpush1.msra.mxu0 0.0
      %762 = vmatprep.subr.mxu0 0.0
      %763 = vmatpush1.msra.mxu0 0.0
      %764 = vmatprep.subr.mxu0 0.0
      %765 = vmatpush1.msra.mxu0 0.0
      %766 = vmatprep.subr.mxu0 0.0
      %767 = vmatpush1.msra.mxu0 0.0
      %768 = vmatprep.subr.mxu0 0.0
      %769 = vmatpush1.msra.mxu0 0.0
      %770 = vmatprep.subr.mxu0 0.0
      %771 = vmatpush1.msra.mxu0 0.0
      %772 = vmatprep.subr.mxu0 0.0
      %773 = vmatpush1.msra.mxu0 0.0
      %774 = vmatprep.subr.mxu0 0.0
      %775 = vmatpush1.msra.mxu0 0.0
      %776 = vmatprep.subr.mxu0 0.0
      %777 = vmatpush1.msra.mxu0 0.0
      %778 = vmatprep.mubr.f32.mxu0 0.0
      %779 = vmatmul.mubr.f32.gmra.mrb[0].mxu0 %v602
      %v780 = vpop.f32.mrb[0].mxu0
      %v781 = vadd.f32 %v706, %v780
      %v782 = vpop.f32.mrb[0].mxu0
      %783 = vmatprep.mubr.f32.mxu0 0.0
      %784 = vmatmul.mubr.f32.gmra.mrb[0].mxu0 %v603
      %v785 = vpop.f32.mrb[0].mxu0
      %v786 = vadd.f32 %v711, %v785
      %v787 = vpop.f32.mrb[0].mxu0
      %788 = vdwg.mxu0
      %v789 = vld [vmem:[#allocation2 + $0x2] sm:$0xff]
      %v790 = vld [vmem:[#allocation2 + $0xa] sm:$0xff]
      %s791 = scalar_lea.vmem %s5, 256
      %v792 = vld [vmem:[%s791] sm:$0xff]
      %v793 = vld [vmem:[%s791 + $0x8] sm:$0xff]
      %v794 = vld [vmem:[%s791 + $0x10] sm:$0xff]
      %v795 = vld [vmem:[%s791 + $0x18] sm:$0xff]
      %v796 = vld [vmem:[%s791 + $0x20] sm:$0xff]
      %v797 = vld [vmem:[%s791 + $0x28] sm:$0xff]
      %v798 = vld [vmem:[%s791 + $0x30] sm:$0xff]
      %v799 = vld [vmem:[%s791 + $0x38] sm:$0xff]
      %v800 = vld [vmem:[%s791 + $0x40] sm:$0xff]
      %v801 = vld [vmem:[%s791 + $0x48] sm:$0xff]
      %v802 = vld [vmem:[%s791 + $0x50] sm:$0xff]
      %v803 = vld [vmem:[%s791 + $0x58] sm:$0xff]
      %v804 = vld [vmem:[%s791 + $0x60] sm:$0xff]
      %v805 = vld [vmem:[%s791 + $0x68] sm:$0xff]
      %v806 = vld [vmem:[%s791 + $0x70] sm:$0xff]
      %v807 = vld [vmem:[%s791 + $0x78] sm:$0xff]
      %808 = vmatprep.subr.mxu0 0.0
      %809 = vmatpush1.msra.mxu0 %v792
      %810 = vmatprep.subr.mxu0 0.0
      %811 = vmatpush1.msra.mxu0 %v793
      %812 = vmatprep.subr.mxu0 0.0
      %813 = vmatpush1.msra.mxu0 %v794
      %814 = vmatprep.subr.mxu0 0.0
      %815 = vmatpush1.msra.mxu0 %v795
      %816 = vmatprep.subr.mxu0 0.0
      %817 = vmatpush1.msra.mxu0 %v796
      %818 = vmatprep.subr.mxu0 0.0
      %819 = vmatpush1.msra.mxu0 %v797
      %820 = vmatprep.subr.mxu0 0.0
      %821 = vmatpush1.msra.mxu0 %v798
      %822 = vmatprep.subr.mxu0 0.0
      %823 = vmatpush1.msra.mxu0 %v799
      %824 = vmatprep.subr.mxu0 0.0
      %825 = vmatpush1.msra.mxu0 %v800
      %826 = vmatprep.subr.mxu0 0.0
      %827 = vmatpush1.msra.mxu0 %v801
      %828 = vmatprep.subr.mxu0 0.0
      %829 = vmatpush1.msra.mxu0 %v802
      %830 = vmatprep.subr.mxu0 0.0
      %831 = vmatpush1.msra.mxu0 %v803
      %832 = vmatprep.subr.mxu0 0.0
      %833 = vmatpush1.msra.mxu0 %v804
      %834 = vmatprep.subr.mxu0 0.0
      %835 = vmatpush1.msra.mxu0 %v805
      %836 = vmatprep.subr.mxu0 0.0
      %837 = vmatpush1.msra.mxu0 %v806
      %838 = vmatprep.subr.mxu0 0.0
      %839 = vmatpush1.msra.mxu0 %v807
      %840 = vmatprep.subr.mxu0 0.0
      %841 = vmatpush1.msra.mxu0 0.0
      %842 = vmatprep.subr.mxu0 0.0
      %843 = vmatpush1.msra.mxu0 0.0
      %844 = vmatprep.subr.mxu0 0.0
      %845 = vmatpush1.msra.mxu0 0.0
      %846 = vmatprep.subr.mxu0 0.0
      %847 = vmatpush1.msra.mxu0 0.0
      %848 = vmatprep.subr.mxu0 0.0
      %849 = vmatpush1.msra.mxu0 0.0
      %850 = vmatprep.subr.mxu0 0.0
      %851 = vmatpush1.msra.mxu0 0.0
      %852 = vmatprep.subr.mxu0 0.0
      %853 = vmatpush1.msra.mxu0 0.0
      %854 = vmatprep.subr.mxu0 0.0
      %855 = vmatpush1.msra.mxu0 0.0
      %856 = vmatprep.subr.mxu0 0.0
      %857 = vmatpush1.msra.mxu0 0.0
      %858 = vmatprep.subr.mxu0 0.0
      %859 = vmatpush1.msra.mxu0 0.0
      %860 = vmatprep.subr.mxu0 0.0
      %861 = vmatpush1.msra.mxu0 0.0
      %862 = vmatprep.subr.mxu0 0.0
      %863 = vmatpush1.msra.mxu0 0.0
      %864 = vmatprep.subr.mxu0 0.0
      %865 = vmatpush1.msra.mxu0 0.0
      %866 = vmatprep.subr.mxu0 0.0
      %867 = vmatpush1.msra.mxu0 0.0
      %868 = vmatprep.subr.mxu0 0.0
      %869 = vmatpush1.msra.mxu0 0.0
      %870 = vmatprep.subr.mxu0 0.0
      %871 = vmatpush1.msra.mxu0 0.0
      %872 = vmatprep.mubr.f32.mxu0 0.0
      %873 = vmatmul.mubr.f32.gmra.mrb[0].mxu0 %v789
      %v874 = vpop.f32.mrb[0].mxu0
      %v875 = vadd.f32 0.0, %v874
      %v876 = vpop.f32.mrb[0].mxu0
      %877 = vmatprep.mubr.f32.mxu0 0.0
      %878 = vmatmul.mubr.f32.gmra.mrb[0].mxu0 %v790
      %v879 = vpop.f32.mrb[0].mxu0
      %v880 = vadd.f32 0.0, %v879
      %v881 = vpop.f32.mrb[0].mxu0
      %882 = vdwg.mxu0
      %v883 = vadd.f32 %v781, %v875
      %v884 = vadd.f32 %v786, %v880
      %v885 = vld [vmem:[%s7] sm:$0x1]
      %v887 = vlaneseq
      %v888 = vshrl.u32 %v887, 7
      %v889 = vsub.s32 0, %v888
      %v890 = vrot.slane %v885, %v889
      %v892 = vadd.f32 %v883, %v890
      %v893 = vadd.f32 %v884, %v890
      %894 = vst [vmem:[%s322] sm:$0xff] %v892
      %895 = vst [vmem:[%s322 + $0x8] sm:$0xff] %v893
      %p896 = scmp.lt.s32.totalorder %s19, 1
      %s897 = scalar_select %p896, %s19, 1
      %s898 = smul.addr %s897, 2
      %s899 = smul.addr %s898, 8
      %s900 = scalar_lea.vmem %s8, %s899
      // Predicated region
      $region53: #{lateral_connect_forward.1} parent=51 // pred_check
        %p901 = pneg %p215
      $region54: #{lateral_connect_forward.1} parent=51 // pred_check_branch
        %903 = sbr.rel (%p901) target = $region56
      $region55: #{lateral_connect_forward.1} parent=51 // pred_region
        _
      $region56: #{lateral_connect_forward.1} parent=51 // pred_fallthru
        _
    $region52: #{lateral_connect_forward.1} parent=5 // pred_fallthru
      _
    %p904 = scmp.le.s32.totalorder 2, %s14
    // Predicated region
    $region57: #{lateral_connect_forward.1} parent=5 // pred_check
      %p905 = pneg %p904
    $region58: #{lateral_connect_forward.1} parent=5 // pred_check_branch
      %907 = sbr.rel (%p905) target = $region60
    $region59: #{lateral_connect_forward.1} parent=5 // pred_region
      %s908 = ssub.s32 %s14, 2
      // Predicated region
      $region61: #{lateral_connect_forward.1} parent=59 // pred_check
        %p909 = pneg %p221
      $region62: #{lateral_connect_forward.1} parent=59 // pred_check_branch
        %911 = sbr.rel (%p909) target = $region64
      $region63: #{lateral_connect_forward.1} parent=59 // pred_region
        %p912 = scmp.lt.s32.totalorder %s20, 1
        %s913 = scalar_select %p912, %s20, 1
        %s914 = smul.addr %s913, 2
        %s915 = smul.addr %s914, 8
        %s916 = scalar_lea.vmem %s8, %s915
      $region64: #{lateral_connect_forward.1} parent=59 // pred_fallthru
        _
    $region60: #{lateral_connect_forward.1} parent=5 // pred_fallthru
      _
  $region6: #{lateral_connect_forward.1} parent=0 // loop_footer
    %s18 = sadd.s32 1, %s14
  $region7: #{lateral_connect_forward.1} parent=0 // loop_footer_branch
    %13 = sbr.rel target = $region3
  $region8: #{lateral_connect_forward.1} parent=0 // loop_exit
    _

</llo_original>
